<compile_context>
chip_gen: v6e
topology: v6e:2x2x1
jax: 0.10.0
libtpu: 0.0.40
codegen_flags: <defaults>
</compile_context>

<pallas_src>
import math

import jax
import jax.numpy as jnp
from jax.experimental import pallas as pl
from jax.experimental.pallas import tpu as pltpu

LANES = 128
_MiB = 1024 * 1024
# Candidate lane widths, widest first (all multiples of 128).
_LANE_CANDIDATES = (8192, 4096, 2048, 1024, 512, 256, LANES)
# Slabs above this get split into >= ~4 grid steps so the "parallel" grid
# axis gives both v7x TensorCores work (no effect on single-TC v5e/v6e).
_MEGACORE_SPLIT_BYTES = 4 * _MiB


def _target_block_bytes():
    """Generation-aware block budget: larger blocks amortize the ~0.35us
    per-grid-step overhead; capped lower on v7x (64 MiB physical VMEM/TC)."""
    try:
        info = pltpu.get_tpu_info()
        vmem = getattr(info, "vmem_capacity_bytes", None)
        if vmem is not None and vmem <= 64 * _MiB:   # v7x-class part
            return 6 * _MiB
        return 8 * _MiB                              # v5e / v6e (128 MiB VMEM)
    except Exception:
        return 6 * _MiB                              # conservative default


def _scale_kernel(scale_ref, x_ref, o_ref):
    # scale_ref: SMEM (1, 1) f32 learnable scalar
    # x_ref / o_ref: VMEM (block_rows, lane) tiles
    x = x_ref[...]
    s = scale_ref[0, 0]
    if x_ref.dtype == jnp.bfloat16:
        # bf16 VALU path (v6e/v7x): avoid a full-tile bf16->f32 upconvert;
        # correct (just slower) on v5e where Mosaic widens internally.
        o_ref[...] = (x * s.astype(jnp.bfloat16)).astype(o_ref.dtype)
    else:
        o_ref[...] = (x.astype(jnp.float32) * s).astype(o_ref.dtype)


def scale_forward(x, scale, *, donate_input=False):
    """Compute x * scale (learnable f32 scalar), matching `x * self.scale`."""
    orig_shape = x.shape
    orig_dtype = x.dtype
    # PyTorch promotion with a 0-dim f32 parameter: float inputs keep their
    # dtype; integer/bool inputs promote to float32.
    if jnp.issubdtype(orig_dtype, jnp.floating):
        out_dtype = orig_dtype
    else:
        out_dtype = jnp.float32

    scale_f32 = jnp.asarray(scale, dtype=jnp.float32)
    n = math.prod(orig_shape)
    itemsize = jnp.dtype(orig_dtype).itemsize
    # Sublane packing: 8 rows/vreg f32, 16 bf16, 32 int8.
    row_pack = max(8, 32 // itemsize)

    # Ragged element counts (or empty input): a fused XLA multiply is a single
    # read+write HBM pass, cheaper than pad + kernel + slice (3x traffic).
    if n == 0 or n % LANES != 0:
        return (x.astype(jnp.float32) * scale_f32).astype(out_dtype)

    # Widest lane extent dividing n that still fills the sublanes
    # (rows >= row_pack). Fall back to the widest divisor (single
    # full-extent block is still a legal BlockSpec).
    lane = None
    for cand in _LANE_CANDIDATES:
        if n % cand == 0 and (n // cand) >= row_pack:
            lane = cand
            break
    if lane is None:
        for cand in _LANE_CANDIDATES:
            if n % cand == 0:
                lane = cand
                break
    rows = n // lane
    x2d = x.reshape(rows, lane)

    bytes_per_row = lane * itemsize
    slab_bytes = rows * bytes_per_row

    # Row blocking: multiple of row_pack, sized to the generation-aware budget.
    tgt_bytes = _target_block_bytes()
    target_rows = max(row_pack, ((tgt_bytes // bytes_per_row) // row_pack) * row_pack)
    block_rows = min(rows, target_rows)
    # Megacore balance (v7x): ensure >= ~4 grid steps for slabs > 4 MiB.
    if slab_bytes > _MEGACORE_SPLIT_BYTES and rows >= 2 * row_pack:
        quarter_rows = max(row_pack, ((rows // 4) // row_pack) * row_pack)
        block_rows = min(block_rows, quarter_rows)

    grid = (pl.cdiv(rows, block_rows),)
    block_bytes = block_rows * bytes_per_row
    # Double-buffered input + output ~= 4x block bytes; leave slack but stay
    # well under v7x's 64 MiB physical VMEM per TensorCore.
    vmem_limit = int(min(48 * _MiB, max(32 * _MiB, 4 * block_bytes + 4 * _MiB)))

    scale_2d = scale_f32.reshape(1, 1)
    out_itemsize = jnp.dtype(out_dtype).itemsize

    kwargs = {}
    if donate_input and out_dtype == orig_dtype:
        # x2d is operand index 1; output reuses its HBM buffer when donated.
        kwargs["input_output_aliases"] = {1: 0}

    out2d = pl.pallas_call(
        _scale_kernel,
        out_shape=jax.ShapeDtypeStruct((rows, lane), out_dtype),
        grid_spec=pltpu.PrefetchScalarGridSpec(
            num_scalar_prefetch=0,
            grid=grid,
            in_specs=[
                pl.BlockSpec(memory_space=pltpu.SMEM),               # scalar param
                pl.BlockSpec((block_rows, lane), lambda i: (i, 0)),  # x slab
            ],
            out_specs=pl.BlockSpec((block_rows, lane), lambda i: (i, 0)),
        ),
        compiler_params=pltpu.CompilerParams(
            # Single streaming axis; "parallel" lets v7x's two TensorCores
            # split the grid (no effect on single-TC v5e/v6e).
            dimension_semantics=("parallel",),
            vmem_limit_bytes=vmem_limit,
        ),
        cost_estimate=pl.CostEstimate(
            flops=n,
            transcendentals=0,
            bytes_accessed=n * (itemsize + out_itemsize),
        ),
        **kwargs,
    )(scale_2d, x2d)

    return out2d.reshape(orig_shape)


if __name__ == "__main__":
    key = jax.random.PRNGKey(0)

    # Deterministic parameter init (PyTorch: nn.Parameter(torch.tensor(scale))).
    init_scale = jnp.float32(2.0)

    # Primary check: small NCHW feature map, f32 (Pallas path).
    x = jax.random.normal(key, (2, 4, 16, 16), dtype=jnp.float32)
    y = jax.block_until_ready(scale_forward(x, init_scale))
    assert y.shape == x.shape and y.dtype == x.dtype
    assert jnp.allclose(y, x * init_scale, atol=1e-6), "f32 mismatch vs reference"

    # Ragged element count exercises the fused-XLA fallback (single HBM pass).
    x_ragged = jax.random.normal(jax.random.PRNGKey(1), (3, 5, 7), dtype=jnp.float32)
    y_ragged = jax.block_until_ready(scale_forward(x_ragged, init_scale))
    assert jnp.allclose(y_ragged, x_ragged * init_scale, atol=1e-6), "ragged mismatch"

    # bf16 input exercises the bf16 multiply path and output-dtype handling.
    x_bf16 = jax.random.normal(jax.random.PRNGKey(2), (2, 4, 16, 16), dtype=jnp.bfloat16)
    y_bf16 = jax.block_until_ready(scale_forward(x_bf16, init_scale))
    ref_bf16 = (x_bf16.astype(jnp.float32) * init_scale).astype(jnp.bfloat16)
    assert jnp.allclose(y_bf16.astype(jnp.float32), ref_bf16.astype(jnp.float32),
                        atol=1e-2, rtol=1e-2), "bf16 mismatch vs reference"

    # Larger slab (8 MiB): exercises the multi-step grid + megacore split path.
    x_big = jax.random.normal(jax.random.PRNGKey(3), (256, 64, 128), dtype=jnp.float32)
    y_big = jax.block_until_ready(scale_forward(x_big, init_scale))
    assert jnp.allclose(y_big, x_big * init_scale, atol=1e-6), "large mismatch"

    print("KERNEL_OK")
</pallas_src>

<mosaic_0001>
module attributes {stable_mosaic.version = 11 : i64} {
  func.func @_scale_kernel(%arg0: i32, %arg1: memref<1x1xf32, #tpu.memory_space<smem>>, %arg2: memref<8x256xf32, #tpu.memory_space<vmem>>, %arg3: memref<8x256xf32, #tpu.memory_space<vmem>>) attributes {dimension_semantics = [#tpu.dimension_semantics<parallel>], iteration_bounds = array<i64: 1>, scalar_prefetch = 0 : i64, scratch_operands = 0 : i64, tpu.core_type = #tpu.core_type<tc>, window_params = [{transform_indices = @transform_0, window_bounds = array<i64: 1, 1>}, {transform_indices = @transform_1, window_bounds = array<i64: 8, 256>}, {transform_indices = @transform_2, window_bounds = array<i64: 8, 256>}]} {
    %c0 = arith.constant 0 : index
    %c0_0 = arith.constant 0 : index
    %0 = vector.load %arg2[%c0, %c0_0] : memref<8x256xf32, #tpu.memory_space<vmem>>, vector<8x256xf32>
    %c0_1 = arith.constant 0 : index
    %c0_2 = arith.constant 0 : index
    %1 = memref.load %arg1[%c0_1, %c0_2] : memref<1x1xf32, #tpu.memory_space<smem>>
    %2 = vector.broadcast %1 : f32 to vector<8x256xf32>
    %3 = arith.mulf %0, %2 : vector<8x256xf32>
    %c0_3 = arith.constant 0 : index
    %c0_4 = arith.constant 0 : index
    %4 = vector.load %arg3[%c0_3, %c0_4] : memref<8x256xf32, #tpu.memory_space<vmem>>, vector<8x256xf32>
    tpu.vector_store %arg3[%c0_3, %c0_4], %3 {strides = array<i32>} : memref<8x256xf32, #tpu.memory_space<vmem>>, vector<8x256xf32>,
    return
  }
  func.func @transform_0(%arg0: i32) -> (i32, i32) {
    %c0_i32 = arith.constant 0 : i32
    %c0_i32_0 = arith.constant 0 : i32
    %c0_i32_1 = arith.constant 0 : i32
    return %c0_i32, %c0_i32_0 : i32, i32
  }
  func.func @transform_1(%arg0: i32) -> (i32, i32) {
    %c0_i32 = arith.constant 0 : i32
    %c0_i32_0 = arith.constant 0 : i32
    return %arg0, %c0_i32 : i32, i32
  }
  func.func @transform_2(%arg0: i32) -> (i32, i32) {
    %c0_i32 = arith.constant 0 : i32
    %c0_i32_0 = arith.constant 0 : i32
    return %arg0, %c0_i32 : i32, i32
  }
}

</mosaic_0001>

<llo_original>
// kernel: tpu_custom_call.1
$region0: #{tpu_custom_call.1}
  #allocation0 [shape = 'u32[]', space=smem, size = 0x4, offset = 0x4, fixed_abs, tag = 'smem constant byte address 0x4 - core index']
  #allocation1 [shape = 'u32[144,128]{1,0:T(1,128)}', space=vmem, size = 0x12000, scoped, tag = 'internal scratch']
  #allocation2 [shape = 'f32[1,1]{1,0:T(1,128)S(6)}', space=smem, size = 0x200, scoped, tag = 'scoped memory for tpu_custom_call.1']
  %s0 = inlined_call_operand.<no memory space> [shape: f32[1,1], index: 0, kind: input, shape index: {}]
  %s1 = inlined_call_operand.hbm [shape: f32[8,256], index: 1, kind: input, shape index: {}]
  %s2 = inlined_call_operand.hbm [shape: f32[8,256], index: 2, kind: output, shape index: {}]
  %s3 = sld [smem:[#allocation0]]
  $region22: #{tpu_custom_call.1} parent=0
    _
  %s5 = ssub.s32 1, %s3
  %s6 = scalar_select 0, %s5, %s3
  %7 = sst [smem:[#allocation2]] %s0
  $region1: #{tpu_custom_call.1} parent=0
    #allocation3 [shape = 'u8[8192]{0}', space=vmem, size = 0x2000, scoped, tag = 'input window, operand 1, single buffered']
    #allocation4 [shape = 's32[1]{0}', space=sflag, size = 0x4, scoped, tag = 'scoped memory for tpu_custom_call.1']
    #allocation5 [shape = 's32[1]{0}', space=sflag, size = 0x4, scoped, tag = 'scoped memory for tpu_custom_call.1']
    #allocation6 [shape = 'u8[8192]{0}', space=vmem, size = 0x2000, scoped, tag = 'output window, operand 0, single buffered']
    %8 = vsyncpa [#allocation4], 0
    %9 = vsyncpa [#allocation5], 0
    // Predicated region
    $region2: #{tpu_custom_call.1} parent=1 // pred_check
      _
    $region3: #{tpu_custom_call.1} parent=1 // pred_check_branch
      %11 = sbr.rel (0) target = $region5
    $region4: #{tpu_custom_call.1} parent=1 // pred_region
      _
    $region5: #{tpu_custom_call.1} parent=1 // pred_fallthru
      _
    // Predicated region
    $region6: #{tpu_custom_call.1} parent=1 // pred_check
      _
    $region7: #{tpu_custom_call.1} parent=1 // pred_check_branch
      %13 = sbr.rel (0) target = $region9
    $region8: #{tpu_custom_call.1} parent=1 // pred_region
      %s15 = ssub.s32 256, 256
      %16 = vsyncadd [#allocation4], %s15
      %s18 = sshll.u32 [#allocation3], 4
      %s19 = int_to_ptr.vmem [resolvable:$true] %s18
      %21 = dma.hbm_to_vmem [thread:$0]  %s1, 256, %s19, [#allocation4]
    $region9: #{tpu_custom_call.1} parent=1 // pred_fallthru
      _
    // Predicated region
    $region10: #{tpu_custom_call.1} parent=1 // pred_check
      _
    $region11: #{tpu_custom_call.1} parent=1 // pred_check_branch
      %23 = sbr.rel (0) target = $region13
    $region12: #{tpu_custom_call.1} parent=1 // pred_region
      %24 = dma.done [#allocation4], 256
    $region13: #{tpu_custom_call.1} parent=1 // pred_fallthru
      _
    %v25 = vld [vmem:[#allocation3] sm:$0xff]
    %v26 = vld [vmem:[#allocation3 + $0x8] sm:$0xff]
    %s27 = sld [smem:[#allocation2]]
    %v28 = vstv %s27
    %v29 = vmul.f32 %v25, %v28
    %v30 = vmul.f32 %v26, %v28
    %31 = vst [vmem:[#allocation6] sm:$0xff] %v29
    %32 = vst [vmem:[#allocation6 + $0x8] sm:$0xff] %v30
    // Predicated region
    $region14: #{tpu_custom_call.1} parent=1 // pred_check
      _
    $region15: #{tpu_custom_call.1} parent=1 // pred_check_branch
      %34 = sbr.rel (0) target = $region17
    $region16: #{tpu_custom_call.1} parent=1 // pred_region
      %s36 = ssub.s32 256, 256
      %37 = vsyncadd [#allocation5], %s36
      %s39 = sshll.u32 [#allocation6], 4
      %s40 = int_to_ptr.vmem [resolvable:$true] %s39
      %42 = dma.vmem_to_hbm [thread:$0]  %s40, 256, %s2, [#allocation5]
    $region17: #{tpu_custom_call.1} parent=1 // pred_fallthru
      _
    // Predicated region
    $region18: #{tpu_custom_call.1} parent=1 // pred_check
      _
    $region19: #{tpu_custom_call.1} parent=1 // pred_check_branch
      %44 = sbr.rel (0) target = $region21
    $region20: #{tpu_custom_call.1} parent=1 // pred_region
      %45 = dma.done [#allocation5], 256
    $region21: #{tpu_custom_call.1} parent=1 // pred_fallthru
      _
    %46 = vsyncpa [#allocation4], 1
    %47 = vsyncpa [#allocation5], 1

</llo_original>
